<compile_context>
chip_gen: v7x
topology: tpu7x:2x2x1
jax: 0.10.0
libtpu: 0.0.40
codegen_flags: <defaults>
</compile_context>

<pallas_src>
import jax
import jax.numpy as jnp
from jax import lax
from jax.experimental import pallas as pl
from jax.experimental.pallas import tpu as pltpu

LN_EPS = 1e-5


def _make_encoder_kernel(h_dim):
    """Build the fused kernel; h_dim is the *real* (unpadded) hidden width."""
    inv_h = 1.0 / float(h_dim)

    def kernel(x_ref, w_ref, b_ref, g_ref, beta_ref, o_ref):
        # Linear: native-dtype operands on the MXU, f32 accumulation.
        h = jnp.dot(x_ref[...], w_ref[...], preferred_element_type=jnp.float32)
        h = h + b_ref[...].astype(jnp.float32)

        # Single-pass LayerNorm statistics over the hidden dim.
        # Padded lanes of W/b are zero, so they contribute nothing to the sums;
        # divide by the true h_dim rather than the padded lane count.
        s1 = jnp.sum(h, axis=-1, keepdims=True)
        s2 = jnp.sum(h * h, axis=-1, keepdims=True)
        mu = s1 * jnp.float32(inv_h)
        var = jnp.maximum(s2 * jnp.float32(inv_h) - mu * mu, 0.0)
        hn = (h - mu) * lax.rsqrt(var + jnp.float32(LN_EPS))
        y = hn * g_ref[...].astype(jnp.float32) + beta_ref[...].astype(jnp.float32)

        # Exact erf GELU (bit-level parity with nn.GELU() default).
        y = 0.5 * y * (1.0 + lax.erf(y * jnp.float32(0.7071067811865476)))

        # Dropout(0.1): identity in eval mode. Padded lanes: gamma=beta=0 -> y=0 -> GELU(0)=0.
        o_ref[...] = y.astype(o_ref.dtype)

    return kernel


def modality_encoder(x, w, b, gamma, beta, *, tm=512):
    """x: (..., input_dim) -> (..., hidden_dim). w is (input_dim, hidden_dim)."""
    orig_shape = x.shape
    d_in = orig_shape[-1]
    h_dim = w.shape[1]

    x2 = x.reshape(-1, d_in)
    n = x2.shape[0]

    # Lane-dense hidden dim: zero-pad params to a multiple of 128 so output stores
    # are full-width unmasked vst (biggest single lever on v5e's single store slot).
    h_pad = int(pl.cdiv(h_dim, 128)) * 128
    if h_pad != h_dim:
        pad = h_pad - h_dim
        w = jnp.pad(w, ((0, 0), (0, pad)))
        b = jnp.pad(b, (0, pad))
        gamma = jnp.pad(gamma, (0, pad))
        beta = jnp.pad(beta, (0, pad))

    # Row tile: multiple of the sublane packing for the input dtype, clamped to the
    # (rounded-up) row count so tiny inputs don't waste work.
    sub = {4: 8, 2: 16, 1: 32}.get(jnp.dtype(x.dtype).itemsize, 8)
    tm = max(sub, min(int(tm), int(pl.cdiv(n, sub)) * sub))
    tm = (tm // sub) * sub

    xbytes = jnp.dtype(x.dtype).itemsize
    wbytes = jnp.dtype(w.dtype).itemsize

    def vmem_estimate(rows):
        return (2 * rows * d_in * xbytes          # double-buffered x tiles
                + 2 * d_in * h_pad * wbytes       # pipelined (resident) weight
                + 2 * 3 * h_pad * 4               # bias / gamma / beta
                + 2 * rows * h_pad * xbytes       # double-buffered output tiles
                + 4 * rows * h_pad * 4)           # f32 intermediates headroom

    # Keep the footprint well under the smallest physical VMEM (v7x: 64 MiB).
    budget = 40 << 20
    while tm > 128 and vmem_estimate(tm) > budget:
        tm = max(128, ((tm // 2) // sub) * sub)
    vmem_limit = int(min(max(vmem_estimate(tm) * 5 // 4, 32 << 20), 64 << 20))

    b2 = b.reshape(1, h_pad)
    g2 = gamma.reshape(1, h_pad)
    bt2 = beta.reshape(1, h_pad)

    grid = (int(pl.cdiv(n, tm)),)   # ragged last block is masked by Pallas

    out = pl.pallas_call(
        _make_encoder_kernel(h_dim),
        out_shape=jax.ShapeDtypeStruct((n, h_pad), x.dtype),
        grid_spec=pltpu.PrefetchScalarGridSpec(
            num_scalar_prefetch=0,
            grid=grid,
            in_specs=[
                pl.BlockSpec((tm, d_in), lambda i: (i, 0)),      # x row tile
                pl.BlockSpec((d_in, h_pad), lambda i: (0, 0)),   # weight (resident)
                pl.BlockSpec((1, h_pad), lambda i: (0, 0)),      # bias
                pl.BlockSpec((1, h_pad), lambda i: (0, 0)),      # ln gamma
                pl.BlockSpec((1, h_pad), lambda i: (0, 0)),      # ln beta
            ],
            out_specs=pl.BlockSpec((tm, h_pad), lambda i: (i, 0)),
        ),
        compiler_params=pltpu.CompilerParams(
            dimension_semantics=("parallel",),   # rows are independent (v7x: 2 TCs)
            vmem_limit_bytes=vmem_limit,
        ),
    )(x2, w, b2, g2, bt2)

    if h_pad != h_dim:
        out = out[:, :h_dim]
    return out.reshape(*orig_shape[:-1], h_dim)


def init_params(key, input_dim, hidden_dim, dtype=jnp.float32):
    """Deterministic parameter init mirroring nn.Linear / nn.LayerNorm shapes."""
    k_w, k_b = jax.random.split(key)
    bound = 1.0 / (input_dim ** 0.5)
    # Stored as (input_dim, hidden_dim) == W^T of PyTorch's (out, in) layout.
    w = jax.random.uniform(k_w, (input_dim, hidden_dim), dtype, -bound, bound)
    b = jax.random.uniform(k_b, (hidden_dim,), dtype, -bound, bound)
    gamma = jnp.ones((hidden_dim,), dtype)
    beta = jnp.zeros((hidden_dim,), dtype)
    return w, b, gamma, beta


if __name__ == "__main__":
    key = jax.random.PRNGKey(0)
    k_x, k_p = jax.random.split(key)

    batch, seq, input_dim, hidden_dim = 2, 8, 16, 32
    x = jax.random.normal(k_x, (batch, seq, input_dim), jnp.float32)
    w, b, gamma, beta = init_params(k_p, input_dim, hidden_dim)

    out = modality_encoder(x, w, b, gamma, beta)
    jax.block_until_ready(out)

    # Pure-JAX reference (PyTorch-equivalent eval-mode math).
    h = x @ w + b
    mu = h.mean(-1, keepdims=True)
    var = ((h - mu) ** 2).mean(-1, keepdims=True)
    hn = (h - mu) / jnp.sqrt(var + LN_EPS)
    y = hn * gamma + beta
    ref = 0.5 * y * (1.0 + lax.erf(y / jnp.sqrt(2.0)))

    assert out.shape == (batch, seq, hidden_dim)
    assert jnp.allclose(out, ref, atol=1e-4, rtol=1e-4), float(jnp.max(jnp.abs(out - ref)))

    print("KERNEL_OK")
</pallas_src>

<mosaic_0001>
module attributes {stable_mosaic.version = 11 : i64} {
  func.func @kernel(%arg0: i32, %arg1: memref<16x16xf32, #tpu.memory_space<vmem>>, %arg2: memref<16x128xf32, #tpu.memory_space<vmem>>, %arg3: memref<1x128xf32, #tpu.memory_space<vmem>>, %arg4: memref<1x128xf32, #tpu.memory_space<vmem>>, %arg5: memref<1x128xf32, #tpu.memory_space<vmem>>, %arg6: memref<16x128xf32, #tpu.memory_space<vmem>>) attributes {dimension_semantics = [#tpu.dimension_semantics<parallel>], iteration_bounds = array<i64: 1>, scalar_prefetch = 0 : i64, scratch_operands = 0 : i64, tpu.core_type = #tpu.core_type<tc>, window_params = [{transform_indices = @transform_0, window_bounds = array<i64: 16, 16>}, {pipeline_mode = #tpu.pipeline_mode<synchronous>, transform_indices = @transform_1, window_bounds = array<i64: 16, 128>}, {pipeline_mode = #tpu.pipeline_mode<synchronous>, transform_indices = @transform_2, window_bounds = array<i64: 1, 128>}, {pipeline_mode = #tpu.pipeline_mode<synchronous>, transform_indices = @transform_3, window_bounds = array<i64: 1, 128>}, {pipeline_mode = #tpu.pipeline_mode<synchronous>, transform_indices = @transform_4, window_bounds = array<i64: 1, 128>}, {transform_indices = @transform_5, window_bounds = array<i64: 16, 128>}]} {
    %c0 = arith.constant 0 : index
    %c0_0 = arith.constant 0 : index
    %0 = vector.load %arg1[%c0, %c0_0] : memref<16x16xf32, #tpu.memory_space<vmem>>, vector<16x16xf32>
    %c0_1 = arith.constant 0 : index
    %c0_2 = arith.constant 0 : index
    %1 = vector.load %arg2[%c0_1, %c0_2] : memref<16x128xf32, #tpu.memory_space<vmem>>, vector<16x128xf32>
    %cst = arith.constant dense<0.000000e+00> : vector<16x128xf32>
    %2 = tpu.matmul %0, %1, %cst {dimension_numbers = #tpu.dot_dimension_numbers<[1], [0], [0], [1], [0, 0, 1, 1], [], []>} : vector<16x16xf32>, vector<16x128xf32>, vector<16x128xf32> -> vector<16x128xf32>
    %c0_3 = arith.constant 0 : index
    %c0_4 = arith.constant 0 : index
    %3 = vector.load %arg3[%c0_3, %c0_4] : memref<1x128xf32, #tpu.memory_space<vmem>>, vector<1x128xf32>
    %4 = vector.broadcast %3 : vector<1x128xf32> to vector<16x128xf32>
    %5 = arith.addf %2, %4 : vector<16x128xf32>
    %cst_5 = arith.constant dense<0.000000e+00> : vector<16xf32>
    %6 = vector.multi_reduction <add>, %5, %cst_5 [1] : vector<16x128xf32> to vector<16xf32>
    %7 = vector.shape_cast %6 : vector<16xf32> to vector<16x1xf32>
    %8 = arith.mulf %5, %5 : vector<16x128xf32>
    %cst_6 = arith.constant dense<0.000000e+00> : vector<16xf32>
    %9 = vector.multi_reduction <add>, %8, %cst_6 [1] : vector<16x128xf32> to vector<16xf32>
    %10 = vector.shape_cast %9 : vector<16xf32> to vector<16x1xf32>
    %cst_7 = arith.constant 3.125000e-02 : f32
    %11 = vector.broadcast %cst_7 : f32 to vector<16x1xf32>
    %12 = arith.mulf %7, %11 : vector<16x1xf32>
    %cst_8 = arith.constant 3.125000e-02 : f32
    %13 = vector.broadcast %cst_8 : f32 to vector<16x1xf32>
    %14 = arith.mulf %10, %13 : vector<16x1xf32>
    %15 = arith.mulf %12, %12 : vector<16x1xf32>
    %16 = arith.subf %14, %15 : vector<16x1xf32>
    %cst_9 = arith.constant 0.000000e+00 : f32
    %17 = vector.broadcast %cst_9 : f32 to vector<16x1xf32>
    %18 = arith.maximumf %16, %17 : vector<16x1xf32>
    %19 = vector.broadcast %12 : vector<16x1xf32> to vector<16x128xf32>
    %20 = arith.subf %5, %19 : vector<16x128xf32>
    %cst_10 = arith.constant 9.99999974E-6 : f32
    %21 = vector.broadcast %cst_10 : f32 to vector<16x1xf32>
    %22 = arith.addf %18, %21 : vector<16x1xf32>
    %23 = math.rsqrt %22 : vector<16x1xf32>
    %24 = vector.broadcast %23 : vector<16x1xf32> to vector<16x128xf32>
    %25 = arith.mulf %20, %24 : vector<16x128xf32>
    %c0_11 = arith.constant 0 : index
    %c0_12 = arith.constant 0 : index
    %26 = vector.load %arg4[%c0_11, %c0_12] : memref<1x128xf32, #tpu.memory_space<vmem>>, vector<1x128xf32>
    %27 = vector.broadcast %26 : vector<1x128xf32> to vector<16x128xf32>
    %28 = arith.mulf %25, %27 : vector<16x128xf32>
    %c0_13 = arith.constant 0 : index
    %c0_14 = arith.constant 0 : index
    %29 = vector.load %arg5[%c0_13, %c0_14] : memref<1x128xf32, #tpu.memory_space<vmem>>, vector<1x128xf32>
    %30 = vector.broadcast %29 : vector<1x128xf32> to vector<16x128xf32>
    %31 = arith.addf %28, %30 : vector<16x128xf32>
    %cst_15 = arith.constant 5.000000e-01 : f32
    %32 = vector.broadcast %cst_15 : f32 to vector<16x128xf32>
    %33 = arith.mulf %32, %31 : vector<16x128xf32>
    %cst_16 = arith.constant 0.707106769 : f32
    %34 = vector.broadcast %cst_16 : f32 to vector<16x128xf32>
    %35 = arith.mulf %31, %34 : vector<16x128xf32>
    %36 = math.erf %35 : vector<16x128xf32>
    %cst_17 = arith.constant 1.000000e+00 : f32
    %37 = vector.broadcast %cst_17 : f32 to vector<16x128xf32>
    %38 = arith.addf %37, %36 : vector<16x128xf32>
    %39 = arith.mulf %33, %38 : vector<16x128xf32>
    %c0_18 = arith.constant 0 : index
    %c0_19 = arith.constant 0 : index
    %40 = vector.load %arg6[%c0_18, %c0_19] : memref<16x128xf32, #tpu.memory_space<vmem>>, vector<16x128xf32>
    tpu.vector_store %arg6[%c0_18, %c0_19], %39 {strides = array<i32>} : memref<16x128xf32, #tpu.memory_space<vmem>>, vector<16x128xf32>,
    return
  }
  func.func @transform_0(%arg0: i32) -> (i32, i32) {
    %c0_i32 = arith.constant 0 : i32
    %c0_i32_0 = arith.constant 0 : i32
    return %arg0, %c0_i32 : i32, i32
  }
  func.func @transform_1(%arg0: i32) -> (i32, i32) {
    %c0_i32 = arith.constant 0 : i32
    %c0_i32_0 = arith.constant 0 : i32
    %c0_i32_1 = arith.constant 0 : i32
    return %c0_i32, %c0_i32_0 : i32, i32
  }
  func.func @transform_2(%arg0: i32) -> (i32, i32) {
    %c0_i32 = arith.constant 0 : i32
    %c0_i32_0 = arith.constant 0 : i32
    %c0_i32_1 = arith.constant 0 : i32
    return %c0_i32, %c0_i32_0 : i32, i32
  }
  func.func @transform_3(%arg0: i32) -> (i32, i32) {
    %c0_i32 = arith.constant 0 : i32
    %c0_i32_0 = arith.constant 0 : i32
    %c0_i32_1 = arith.constant 0 : i32
    return %c0_i32, %c0_i32_0 : i32, i32
  }
  func.func @transform_4(%arg0: i32) -> (i32, i32) {
    %c0_i32 = arith.constant 0 : i32
    %c0_i32_0 = arith.constant 0 : i32
    %c0_i32_1 = arith.constant 0 : i32
    return %c0_i32, %c0_i32_0 : i32, i32
  }
  func.func @transform_5(%arg0: i32) -> (i32, i32) {
    %c0_i32 = arith.constant 0 : i32
    %c0_i32_0 = arith.constant 0 : i32
    return %arg0, %c0_i32 : i32, i32
  }
}

</mosaic_0001>

<llo_original>
// kernel: tpu_custom_call.1
$region0: #{tpu_custom_call.1}
  #allocation0 [shape = 'u32[]', space=smem, size = 0x4, offset = 0x4, fixed_abs, tag = 'smem constant byte address 0x4 - core index']
  #allocation1 [shape = 'u32[144,128]{1,0:T(1,128)}', space=vmem, size = 0x12000, scoped, tag = 'internal scratch']
  %s0 = inlined_call_operand.hbm [shape: f32[16,16], index: 0, kind: input, shape index: {}]
  %s1 = inlined_call_operand.hbm [shape: f32[16,128], index: 1, kind: input, shape index: {}]
  %s2 = inlined_call_operand.vmem [shape: f32[1,128], index: 2, kind: input, shape index: {}]
  %s3 = inlined_call_operand.vmem [shape: f32[1,128], index: 3, kind: input, shape index: {}]
  %s4 = inlined_call_operand.vmem [shape: f32[1,128], index: 4, kind: input, shape index: {}]
  %s5 = inlined_call_operand.hbm [shape: f32[16,128], index: 5, kind: output, shape index: {}]
  %s6 = sld [smem:[#allocation0]]
  $region38: #{tpu_custom_call.1} parent=0
    _
  %s8 = ssub.s32 1, %s6
  %s9 = scalar_select 0, %s8, %s6
  $region1: #{tpu_custom_call.1} parent=0
    #allocation2 [shape = 'u8[8192]{0}', space=vmem, size = 0x2000, scoped, tag = 'input window, operand 0, single buffered']
    #allocation3 [shape = 's32[1]{0}', space=sflag, size = 0x4, scoped, tag = 'scoped memory for tpu_custom_call.1']
    #allocation4 [shape = 's32[1]{0}', space=sflag, size = 0x4, scoped, tag = 'scoped memory for tpu_custom_call.1']
    #allocation5 [shape = 'u8[8192]{0}', space=vmem, size = 0x2000, scoped, tag = 'input window, operand 1, single buffered']
    #allocation6 [shape = 's32[1]{0}', space=sflag, size = 0x4, scoped, tag = 'scoped memory for tpu_custom_call.1']
    #allocation7 [shape = 'u8[8192]{0}', space=vmem, size = 0x2000, scoped, tag = 'output window, operand 0, single buffered']
    %10 = vsyncpa [#allocation3], 0
    %11 = vsyncpa [#allocation6], 0
    %12 = vsyncpa [#allocation4], 0
    // Predicated region
    $region2: #{tpu_custom_call.1} parent=1 // pred_check
      _
    $region3: #{tpu_custom_call.1} parent=1 // pred_check_branch
      %14 = sbr.rel (0) target = $region5
    $region4: #{tpu_custom_call.1} parent=1 // pred_region
      %s16 = ssub.s32 256, 256
      %17 = vsyncadd [#allocation3], %s16
      %s18 = sshll.u32 [#allocation2], 4
      %s19 = int_to_ptr.vmem [resolvable:$true] %s18
      %24 = dma.hbm_to_vmem [thread:$0]  %s0, 256, %s19, [#allocation3], 128, 128, 8
    $region5: #{tpu_custom_call.1} parent=1 // pred_fallthru
      _
    // Predicated region
    $region6: #{tpu_custom_call.1} parent=1 // pred_check
      _
    $region7: #{tpu_custom_call.1} parent=1 // pred_check_branch
      %26 = sbr.rel (0) target = $region9
    $region8: #{tpu_custom_call.1} parent=1 // pred_region
      %s28 = ssub.s32 256, 256
      %29 = vsyncadd [#allocation6], %s28
      %s30 = sshll.u32 [#allocation5], 4
      %s31 = int_to_ptr.vmem [resolvable:$true] %s30
      %36 = dma.hbm_to_vmem [thread:$0]  %s1, 256, %s31, [#allocation6], 128, 128, 8
    $region9: #{tpu_custom_call.1} parent=1 // pred_fallthru
      _
    // Predicated region
    $region10: #{tpu_custom_call.1} parent=1 // pred_check
      _
    $region11: #{tpu_custom_call.1} parent=1 // pred_check_branch
      %38 = sbr.rel (0) target = $region13
    $region12: #{tpu_custom_call.1} parent=1 // pred_region
      _
    $region13: #{tpu_custom_call.1} parent=1 // pred_fallthru
      _
    // Predicated region
    $region14: #{tpu_custom_call.1} parent=1 // pred_check
      _
    $region15: #{tpu_custom_call.1} parent=1 // pred_check_branch
      %40 = sbr.rel (0) target = $region17
    $region16: #{tpu_custom_call.1} parent=1 // pred_region
      _
    $region17: #{tpu_custom_call.1} parent=1 // pred_fallthru
      _
    // Predicated region
    $region18: #{tpu_custom_call.1} parent=1 // pred_check
      _
    $region19: #{tpu_custom_call.1} parent=1 // pred_check_branch
      %42 = sbr.rel (0) target = $region21
    $region20: #{tpu_custom_call.1} parent=1 // pred_region
      _
    $region21: #{tpu_custom_call.1} parent=1 // pred_fallthru
      _
    // Predicated region
    $region22: #{tpu_custom_call.1} parent=1 // pred_check
      _
    $region23: #{tpu_custom_call.1} parent=1 // pred_check_branch
      %44 = sbr.rel (0) target = $region25
    $region24: #{tpu_custom_call.1} parent=1 // pred_region
      %45 = dma.done [#allocation3], 256
    $region25: #{tpu_custom_call.1} parent=1 // pred_fallthru
      _
    // Predicated region
    $region26: #{tpu_custom_call.1} parent=1 // pred_check
      _
    $region27: #{tpu_custom_call.1} parent=1 // pred_check_branch
      %47 = sbr.rel (0) target = $region29
    $region28: #{tpu_custom_call.1} parent=1 // pred_region
      %48 = dma.done [#allocation6], 256
    $region29: #{tpu_custom_call.1} parent=1 // pred_fallthru
      _
    %v49 = vld [vmem:[#allocation2] sm:$0xff]
    %v50 = vld [vmem:[#allocation2 + $0x8] sm:$0xff]
    %v51 = vld [vmem:[#allocation5] sm:$0xff]
    %v52 = vld [vmem:[#allocation5 + $0x8] sm:$0xff]
    %v53 = vld [vmem:[%s2] sm:$0x1]
    %v55 = vlaneseq
    %v56 = vshrl.u32 %v55, 7
    %v57 = vsub.s32 0, %v56
    %v58 = vrot.slane %v53, %v57
    %vm60 = vcmask 130048
    %v62 = vsel %vm60, %v49, 0
    %v65 = vsel %vm60, %v50, 0
    %67 = vmatprep.subr.mxu0 0.0
    %68 = vmatpush1.msra.mxu0 %v51
    %69 = vmatprep.subr.mxu0 0.0
    %70 = vmatpush1.msra.mxu0 %v52
    %71 = vmatprep.subr.mxu0 0.0
    %72 = vmatpush1.msra.mxu0 0.0
    %73 = vmatprep.subr.mxu0 0.0
    %74 = vmatpush1.msra.mxu0 0.0
    %75 = vmatprep.subr.mxu0 0.0
    %76 = vmatpush1.msra.mxu0 0.0
    %77 = vmatprep.subr.mxu0 0.0
    %78 = vmatpush1.msra.mxu0 0.0
    %79 = vmatprep.subr.mxu0 0.0
    %80 = vmatpush1.msra.mxu0 0.0
    %81 = vmatprep.subr.mxu0 0.0
    %82 = vmatpush1.msra.mxu0 0.0
    %83 = vmatprep.subr.mxu0 0.0
    %84 = vmatpush1.msra.mxu0 0.0
    %85 = vmatprep.subr.mxu0 0.0
    %86 = vmatpush1.msra.mxu0 0.0
    %87 = vmatprep.subr.mxu0 0.0
    %88 = vmatpush1.msra.mxu0 0.0
    %89 = vmatprep.subr.mxu0 0.0
    %90 = vmatpush1.msra.mxu0 0.0
    %91 = vmatprep.subr.mxu0 0.0
    %92 = vmatpush1.msra.mxu0 0.0
    %93 = vmatprep.subr.mxu0 0.0
    %94 = vmatpush1.msra.mxu0 0.0
    %95 = vmatprep.subr.mxu0 0.0
    %96 = vmatpush1.msra.mxu0 0.0
    %97 = vmatprep.subr.mxu0 0.0
    %98 = vmatpush1.msra.mxu0 0.0
    %99 = vmatprep.subr.mxu0 0.0
    %100 = vmatpush1.msra.mxu0 0.0
    %101 = vmatprep.subr.mxu0 0.0
    %102 = vmatpush1.msra.mxu0 0.0
    %103 = vmatprep.subr.mxu0 0.0
    %104 = vmatpush1.msra.mxu0 0.0
    %105 = vmatprep.subr.mxu0 0.0
    %106 = vmatpush1.msra.mxu0 0.0
    %107 = vmatprep.subr.mxu0 0.0
    %108 = vmatpush1.msra.mxu0 0.0
    %109 = vmatprep.subr.mxu0 0.0
    %110 = vmatpush1.msra.mxu0 0.0
    %111 = vmatprep.subr.mxu0 0.0
    %112 = vmatpush1.msra.mxu0 0.0
    %113 = vmatprep.subr.mxu0 0.0
    %114 = vmatpush1.msra.mxu0 0.0
    %115 = vmatprep.subr.mxu0 0.0
    %116 = vmatpush1.msra.mxu0 0.0
    %117 = vmatprep.subr.mxu0 0.0
    %118 = vmatpush1.msra.mxu0 0.0
    %119 = vmatprep.subr.mxu0 0.0
    %120 = vmatpush1.msra.mxu0 0.0
    %121 = vmatprep.subr.mxu0 0.0
    %122 = vmatpush1.msra.mxu0 0.0
    %123 = vmatprep.subr.mxu0 0.0
    %124 = vmatpush1.msra.mxu0 0.0
    %125 = vmatprep.subr.mxu0 0.0
    %126 = vmatpush1.msra.mxu0 0.0
    %127 = vmatprep.subr.mxu0 0.0
    %128 = vmatpush1.msra.mxu0 0.0
    %129 = vmatprep.subr.mxu0 0.0
    %130 = vmatpush1.msra.mxu0 0.0
    %131 = vmatprep.mubr.f32.mxu0 0.0
    %132 = vmatmul.mubr.f32.gmra.mrb[0].mxu0 %v62
    %v133 = vpop.f32.mrb[0].mxu0
    %v134 = vadd.f32 %v58, %v133
    %v135 = vpop.f32.mrb[0].mxu0
    %136 = vmatprep.mubr.f32.mxu0 0.0
    %137 = vmatmul.mubr.f32.gmra.mrb[0].mxu0 %v65
    %v138 = vpop.f32.mrb[0].mxu0
    %v139 = vadd.f32 %v58, %v138
    %v140 = vpop.f32.mrb[0].mxu0
    %141 = vdwg.mxu0
    %142 = vadd.xlane.f32.xlu0 %v134
    %v143 = vpop.xlane.xlu0 %142
    %144 = vadd.xlane.f32.xlu0 %v139
    %v145 = vpop.xlane.xlu0 %144
    %v146 = vmul.f32 %v134, %v134
    %v147 = vmul.f32 %v139, %v139
    %148 = vadd.xlane.f32.xlu0 %v146
    %v149 = vpop.xlane.xlu0 %148
    %150 = vadd.xlane.f32.xlu0 %v147
    %v151 = vpop.xlane.xlu0 %150
    %v152 = vmul.f32 %v143, 0.03125
    %v153 = vmul.f32 %v145, 0.03125
    %v154 = vmul.f32 %v149, 0.03125
    %v155 = vmul.f32 %v151, 0.03125
    %v156 = vmul.f32 %v152, %v152
    %v157 = vmul.f32 %v153, %v153
    %v158 = vsub.f32 %v154, %v156
    %v159 = vsub.f32 %v155, %v157
    %v160 = vmax.f32 %v158, 0.0
    %v161 = vmax.f32 %v159, 0.0
    %v162 = vsub.f32 %v134, %v152
    %v163 = vsub.f32 %v139, %v153
    %v164 = vadd.f32 %v160, 1e-05
    %v165 = vadd.f32 %v161, 1e-05
    %v166 = vrsqrt.pop %v164
    %v167 = vrsqrt.pop %v165
    %v168 = vmul.f32 %v162, %v166
    %v169 = vmul.f32 %v163, %v167
    %v170 = vld [vmem:[%s3] sm:$0x1]
    %v172 = vlaneseq
    %v173 = vshrl.u32 %v172, 7
    %v174 = vsub.s32 0, %v173
    %v175 = vrot.slane %v170, %v174
    %v177 = vmul.f32 %v168, %v175
    %v178 = vmul.f32 %v169, %v175
    %v179 = vld [vmem:[%s4] sm:$0x1]
    %v181 = vlaneseq
    %v182 = vshrl.u32 %v181, 7
    %v183 = vsub.s32 0, %v182
    %v184 = vrot.slane %v179, %v183
    %v186 = vadd.f32 %v177, %v184
    %v187 = vadd.f32 %v178, %v184
    %v188 = vmul.f32 %v186, 0.5
    %v189 = vmul.f32 %v187, 0.5
    %v190 = vmul.f32 %v186, 0.70710677
    %v191 = vmul.f32 %v187, 0.70710677
    %v192 = verf.f32.pop %v190
    %v193 = verf.f32.pop %v191
    %v194 = vadd.f32 %v192, 1.0
    %v195 = vadd.f32 %v193, 1.0
    %v196 = vmul.f32 %v188, %v194
    %v197 = vmul.f32 %v189, %v195
    %198 = vst [vmem:[#allocation7] sm:$0xff] %v196
    %199 = vst [vmem:[#allocation7 + $0x8] sm:$0xff] %v197
    // Predicated region
    $region30: #{tpu_custom_call.1} parent=1 // pred_check
      _
    $region31: #{tpu_custom_call.1} parent=1 // pred_check_branch
      %201 = sbr.rel (0) target = $region33
    $region32: #{tpu_custom_call.1} parent=1 // pred_region
      %s203 = ssub.s32 256, 256
      %204 = vsyncadd [#allocation4], %s203
      %s205 = sshll.u32 [#allocation7], 4
      %s206 = int_to_ptr.vmem [resolvable:$true] %s205
      %211 = dma.vmem_to_hbm [thread:$0]  %s206, 256, %s5, [#allocation4], 128, 128, 8
    $region33: #{tpu_custom_call.1} parent=1 // pred_fallthru
      _
    // Predicated region
    $region34: #{tpu_custom_call.1} parent=1 // pred_check
      _
    $region35: #{tpu_custom_call.1} parent=1 // pred_check_branch
      %213 = sbr.rel (0) target = $region37
    $region36: #{tpu_custom_call.1} parent=1 // pred_region
      %214 = dma.done [#allocation4], 256
    $region37: #{tpu_custom_call.1} parent=1 // pred_fallthru
      _
    %215 = vsyncpa [#allocation3], 1
    %216 = vsyncpa [#allocation6], 1
    %217 = vsyncpa [#allocation4], 1

</llo_original>
